<compile_context>
chip_gen: v7x
topology: tpu7x:2x2x1
jax: 0.10.0
libtpu: 0.0.40
codegen_flags: <defaults>
</compile_context>

<pallas_src>
import jax
import jax.numpy as jnp
from jax.experimental import pallas as pl
from jax.experimental.pallas import tpu as pltpu


def _residual_conv1x1_kernel(x_ref, w_ref, b_ref, o_ref):
    # x_ref / o_ref: (C, HW_TILE) tile, HW on lanes
    # w_ref:         (C, C) 1x1-conv weight (out-channel x in-channel)
    # b_ref:         (C, 1) bias in f32 (broadcast over lanes)
    x = x_ref[...]
    y = jnp.dot(w_ref[...], x, preferred_element_type=jnp.float32)  # (C, T) on MXU
    y = y + b_ref[...]
    # residual: out = x + m(x), accumulate in f32 then cast back
    o_ref[...] = (x.astype(jnp.float32) + y).astype(o_ref.dtype)


def _round_up(x, m):
    return ((x + m - 1) // m) * m


def _sublane_tile(itemsize):
    # Physical sublane tile per dtype width: f32 -> 8, bf16 -> 16, int8/fp8 -> 32.
    return {4: 8, 2: 16, 1: 32}.get(itemsize, 8)


def _largest_even_tile(HW, cap):
    """Largest multiple of 128 <= cap that divides HW evenly; else largest multiple of 128 <= cap."""
    cap = max((cap // 128) * 128, 128)
    t = cap
    while t >= 128:
        if HW % t == 0:
            return t
        t -= 128
    return cap


def _fixed_bytes(C, w_itemsize, wb_bufs):
    """VMEM footprint of the (grid-invariant) weight + bias blocks, incl. padding."""
    w_rows = _round_up(C, _sublane_tile(w_itemsize))
    w_cols = max(_round_up(C, 128), 128)
    b_rows = _round_up(C, 8)  # bias kept f32
    return wb_bufs * (w_rows * w_cols * w_itemsize + b_rows * 128 * 4)


def _act_bytes_per_lane(C, x_itemsize):
    """Per-lane VMEM cost of the activation path: 2 dbl-buffered inputs + 2 outputs."""
    c_pad = _round_up(C, _sublane_tile(x_itemsize))
    return 4 * c_pad * x_itemsize


def _vmem_bytes(C, hw_tile, x_itemsize, w_itemsize, wb_bufs):
    return _fixed_bytes(C, w_itemsize, wb_bufs) + _act_bytes_per_lane(C, x_itemsize) * hw_tile


def _pick_hw_tile(N, C, HW, x_itemsize, w_itemsize, budget_bytes, wb_bufs):
    """Lane tile: as large as the VMEM budget allows, even-dividing HW, with enough
    grid blocks for both v7x TensorCores."""
    fixed = _fixed_bytes(C, w_itemsize, wb_bufs)
    per_lane = _act_bytes_per_lane(C, x_itemsize)
    max_t = max(((budget_bytes - fixed) // per_lane // 128) * 128, 128)

    if HW <= max_t:
        tile = HW  # single full-extent tile (block dim == full array dim is always legal)
    else:
        tile = _largest_even_tile(HW, max_t)

    # Megacore: make sure there are >= ~4 grid blocks total (2 per core on v7x) when
    # the spatial extent is large enough to split into >=128-lane tiles.
    min_blocks = 4
    if N * pl.cdiv(HW, tile) < min_blocks:
        want_tiles = -(-min_blocks // N)  # ceil(min_blocks / N)
        if HW >= want_tiles * 128:
            target = min(max((HW // want_tiles // 128) * 128, 128), max_t)
            tile = _largest_even_tile(HW, target)
    return tile


def residual_conv1x1(x_nchw, weight, bias, *, vmem_budget_bytes=40 * 1024 * 1024):
    """out = x + conv1x1(x).  x_nchw: (N, C, H, W); weight: (C_out, C_in); bias: (C_out,)."""
    N, C, H, W = x_nchw.shape
    assert weight.shape == (C, C) and bias.shape == (C,)
    HW = H * W

    # NCHW -> (N, C, H*W): pure reshape of contiguous memory, no transpose.
    x3 = x_nchw.reshape(N, C, HW)
    # bf16 activations: feed the MXU bf16 x bf16 (f32 accumulate) instead of upcasting
    # the whole activation tile on the VPU.
    w = weight.astype(x3.dtype) if x3.dtype == jnp.bfloat16 else weight
    b_col = bias.astype(jnp.float32).reshape(C, 1)

    # Large weights (C >= 512, i.e. >= 1 MiB f32) are grid-invariant: single-buffer them.
    wb_bufs = 1 if C >= 512 else 2
    budget = min(int(vmem_budget_bytes), 40 << 20)  # stay well under v7x's 64 MiB VMEM

    hw_tile = _pick_hw_tile(N, C, HW, x3.dtype.itemsize, w.dtype.itemsize, budget, wb_bufs)
    grid = (N, pl.cdiv(HW, hw_tile))

    vmem_needed = _vmem_bytes(C, hw_tile, x3.dtype.itemsize, w.dtype.itemsize, wb_bufs)
    # 4 MiB slack for compiler-internal scratch; floor 24 MiB, ceiling 48 MiB (v7x-safe).
    vmem_limit = int(min(max(vmem_needed + (4 << 20), 24 << 20), 48 << 20))

    wb_kwargs = {"pipeline_mode": pl.Buffered(1)} if wb_bufs == 1 else {}

    out3 = pl.pallas_call(
        _residual_conv1x1_kernel,
        out_shape=jax.ShapeDtypeStruct((N, C, HW), x3.dtype),
        grid_spec=pltpu.PrefetchScalarGridSpec(
            num_scalar_prefetch=0,
            grid=grid,
            in_specs=[
                # activations: one batch element, one spatial tile (HW on lanes)
                pl.BlockSpec((None, C, hw_tile), lambda n, j: (n, 0, j)),
                # grid-invariant weight / bias (constant index_map -> DMA'd once)
                pl.BlockSpec((C, C), lambda n, j: (0, 0), **wb_kwargs),
                pl.BlockSpec((C, 1), lambda n, j: (0, 0), **wb_kwargs),
            ],
            out_specs=pl.BlockSpec((None, C, hw_tile), lambda n, j: (n, 0, j)),
        ),
        compiler_params=pltpu.CompilerParams(
            dimension_semantics=("parallel", "parallel"),
            vmem_limit_bytes=vmem_limit,
        ),
        # NOTE: no input_output_aliases — without an explicit donation contract XLA
        # would insert a defensive full-tensor copy, costing more than it saves.
    )(x3, w, b_col)

    # (N, C, H*W) -> NCHW: again a free reshape.
    return out3.reshape(N, C, H, W)


if __name__ == "__main__":
    key = jax.random.PRNGKey(0)
    kx, kw, kb = jax.random.split(key, 3)

    N, C, H, W = 2, 4, 16, 16
    x = jax.random.normal(kx, (N, C, H, W), dtype=jnp.float32)

    # deterministic "Conv2d(C, C, 1)" parameters
    weight = jax.random.normal(kw, (C, C), dtype=jnp.float32) * 0.1  # (C_out, C_in)
    bias = jax.random.normal(kb, (C,), dtype=jnp.float32) * 0.1

    # plain-JAX reference:  x + conv1x1(x)
    ref = x + (jnp.einsum("oc,nchw->nohw", weight, x) + bias[None, :, None, None])
    ref = jax.block_until_ready(ref)

    out = residual_conv1x1(x, weight, bias)
    out = jax.block_until_ready(out)

    assert out.shape == (N, C, H, W)
    assert jnp.allclose(out, ref, atol=1e-5, rtol=1e-5), "mismatch vs reference"

    print("KERNEL_OK")
</pallas_src>

<mosaic_0001>
module attributes {stable_mosaic.version = 11 : i64} {
  func.func @_residual_conv1x1_kernel(%arg0: i32, %arg1: i32, %arg2: memref<1x4x128xf32, #tpu.memory_space<vmem>>, %arg3: memref<4x4xf32, #tpu.memory_space<vmem>>, %arg4: memref<4x1xf32, #tpu.memory_space<vmem>>, %arg5: memref<1x4x128xf32, #tpu.memory_space<vmem>>) attributes {dimension_semantics = [#tpu.dimension_semantics<parallel>, #tpu.dimension_semantics<parallel>], iteration_bounds = array<i64: 2, 2>, scalar_prefetch = 0 : i64, scratch_operands = 0 : i64, tpu.core_type = #tpu.core_type<tc>, window_params = [{transform_indices = @transform_0, window_bounds = array<i64: 1, 4, 128>}, {pipeline_mode = #tpu.pipeline_mode<synchronous>, transform_indices = @transform_1, window_bounds = array<i64: 4, 4>}, {pipeline_mode = #tpu.pipeline_mode<synchronous>, transform_indices = @transform_2, window_bounds = array<i64: 4, 1>}, {transform_indices = @transform_3, window_bounds = array<i64: 1, 4, 128>}]} {
    %c0 = arith.constant 0 : index
    %c0_0 = arith.constant 0 : index
    %c0_1 = arith.constant 0 : index
    %0 = vector.load %arg2[%c0, %c0_0, %c0_1] : memref<1x4x128xf32, #tpu.memory_space<vmem>>, vector<1x4x128xf32>
    %1 = vector.shape_cast %0 : vector<1x4x128xf32> to vector<4x128xf32>
    %c0_2 = arith.constant 0 : index
    %c0_3 = arith.constant 0 : index
    %2 = vector.load %arg3[%c0_2, %c0_3] : memref<4x4xf32, #tpu.memory_space<vmem>>, vector<4x4xf32>
    %cst = arith.constant dense<0.000000e+00> : vector<4x128xf32>
    %3 = tpu.matmul %2, %1, %cst {dimension_numbers = #tpu.dot_dimension_numbers<[1], [0], [0], [1], [0, 0, 1, 1], [], []>} : vector<4x4xf32>, vector<4x128xf32>, vector<4x128xf32> -> vector<4x128xf32>
    %c0_4 = arith.constant 0 : index
    %c0_5 = arith.constant 0 : index
    %4 = vector.load %arg4[%c0_4, %c0_5] : memref<4x1xf32, #tpu.memory_space<vmem>>, vector<4x1xf32>
    %5 = vector.broadcast %4 : vector<4x1xf32> to vector<4x128xf32>
    %6 = arith.addf %3, %5 : vector<4x128xf32>
    %7 = arith.addf %1, %6 : vector<4x128xf32>
    %c0_6 = arith.constant 0 : index
    %c0_7 = arith.constant 0 : index
    %c0_8 = arith.constant 0 : index
    %8 = vector.load %arg5[%c0_6, %c0_7, %c0_8] : memref<1x4x128xf32, #tpu.memory_space<vmem>>, vector<1x4x128xf32>
    %9 = vector.shape_cast %8 : vector<1x4x128xf32> to vector<4x128xf32>
    %10 = vector.shape_cast %7 : vector<4x128xf32> to vector<1x4x128xf32>
    tpu.vector_store %arg5[%c0_6, %c0_7, %c0_8], %10 {strides = array<i32>} : memref<1x4x128xf32, #tpu.memory_space<vmem>>, vector<1x4x128xf32>,
    return
  }
  func.func @transform_0(%arg0: i32, %arg1: i32) -> (i32, i32, i32) {
    %c0_i32 = arith.constant 0 : i32
    %c0_i32_0 = arith.constant 0 : i32
    return %arg0, %c0_i32, %arg1 : i32, i32, i32
  }
  func.func @transform_1(%arg0: i32, %arg1: i32) -> (i32, i32) {
    %c0_i32 = arith.constant 0 : i32
    %c0_i32_0 = arith.constant 0 : i32
    %c0_i32_1 = arith.constant 0 : i32
    return %c0_i32, %c0_i32_0 : i32, i32
  }
  func.func @transform_2(%arg0: i32, %arg1: i32) -> (i32, i32) {
    %c0_i32 = arith.constant 0 : i32
    %c0_i32_0 = arith.constant 0 : i32
    %c0_i32_1 = arith.constant 0 : i32
    return %c0_i32, %c0_i32_0 : i32, i32
  }
  func.func @transform_3(%arg0: i32, %arg1: i32) -> (i32, i32, i32) {
    %c0_i32 = arith.constant 0 : i32
    %c0_i32_0 = arith.constant 0 : i32
    return %arg0, %c0_i32, %arg1 : i32, i32, i32
  }
}

</mosaic_0001>

<llo_original>
// kernel: tpu_custom_call.1
$region0: #{tpu_custom_call.1}
  #allocation0 [shape = 'u32[]', space=smem, size = 0x4, offset = 0x4, fixed_abs, tag = 'smem constant byte address 0x4 - core index']
  #allocation1 [shape = 'u32[144,128]{1,0:T(1,128)}', space=vmem, size = 0x12000, scoped, tag = 'internal scratch']
  %s0 = inlined_call_operand.hbm [shape: f32[2,4,256], index: 0, kind: input, shape index: {}]
  %s1 = inlined_call_operand.vmem [shape: f32[4,4], index: 1, kind: input, shape index: {}]
  %s2 = inlined_call_operand.vmem [shape: f32[4,1], index: 2, kind: input, shape index: {}]
  %s3 = inlined_call_operand.hbm [shape: f32[2,4,256], index: 3, kind: output, shape index: {}]
  %s4 = sld [smem:[#allocation0]]
  $region49: #{tpu_custom_call.1} parent=0
    _
  %s6 = ssub.s32 1, %s4
  %s7 = scalar_select 0, %s6, %s4
  $region1: #{tpu_custom_call.1} parent=0
    #allocation2 [shape = 'u8[4096]{0}', space=vmem, size = 0x1000, scoped, tag = 'input window, operand 0']
    #allocation3 [shape = 's32[2]{0}', space=sflag, size = 0x8, scoped, tag = 'scoped memory for tpu_custom_call.1']
    #allocation4 [shape = 's32[2]{0}', space=sflag, size = 0x8, scoped, tag = 'scoped memory for tpu_custom_call.1']
    #allocation5 [shape = 'u8[4096]{0}', space=vmem, size = 0x1000, scoped, tag = 'output window, operand 0']
    %8 = vsyncpa [#allocation3], 0
    %s9 = scalar_lea.sflag [#allocation3], 1
    %10 = vsyncpa %s9, 0
    %11 = vsyncpa [#allocation4], 0
    %s12 = scalar_lea.sflag [#allocation4], 1
    %13 = vsyncpa %s12, 0
    loop: start=0, step=1, limit=6
    $region2: #{tpu_custom_call.1} parent=1 // loop_pre_header
      _
    $region3: #{tpu_custom_call.1} parent=1 // loop_header
      %s15 = sphi 0, %s19
      %p16 = scmp.ge.s32.totalorder %s15, 6
      %s22 = sphi 0, %s34
      %s23 = sphi 0, %s30
      %s24 = sphi 0, %s22
      %s25 = sphi 0, %s23
      %s26 = sphi 0, %s24
      %s27 = sphi 0, %s25
      %s39 = sphi 0, %s41
      %s42 = sphi 0, %s39
      %s43 = sphi 0, %s42
      %s59 = sphi 0, %s43
      %s63 = sphi 0, %s63
      %s65 = sphi 0, %s63
      %s66 = sphi 0, %s65
      %s80 = sphi 0, %s66
      %s84 = sphi 0, %s84
      %s86 = sphi 0, %s84
      %s87 = sphi 0, %s86
      %s101 = sphi 0, %s87
      %s109 = sphi 0, %s111
      %s112 = sphi 0, %s109
      %s113 = sphi 0, %s112
      %s129 = sphi 0, %s113
    $region4: #{tpu_custom_call.1} parent=1 // loop_header_branch
      %18 = sbr.rel (%p16) target = $region8
    $region5: #{tpu_custom_call.1} parent=1 // loop_body
      %s20 = ssub.s32 %s15, 1
      %s21 = ssub.s32 %s15, 2
      %s28 = sadd.s32 1, %s23
      %p29 = scmp.ge.s32.totalorder %s28, 2
      %s30 = scalar_select %p29, 0, %s28
      %s31 = sadd.s32 1, %s22
      %s32 = scalar_select %p29, %s31, %s22
      %p33 = scmp.ge.s32.totalorder %s32, 2
      %s34 = scalar_select %p33, 0, %s32
      %s35 = ssub.s32 %s22, %s34
      %s36 = ssub.s32 %s23, %s30
      %s37 = sor.u32 %s35, %s36
      %p38 = scmp.eq.s32.totalorder %s37, 0
      %s40 = sadd.s32 %s39, 1
      %s41 = scalar_select %p38, %s39, %s40
      %p44 = pneg %p38
      %p45 = scmp.eq.s32.totalorder %s15, 3
      %p46 = por %p44, %p45
      %p47 = scmp.ne.s32.totalorder %s39, %s42
      %p48 = scmp.eq.s32.totalorder %s15, 0
      %p49 = por %p47, %p48
      %p50 = scmp.ne.s32.totalorder %s39, %s42
      %p51 = scmp.eq.s32.totalorder %s20, 3
      %p52 = por %p50, %p51
      %p53 = scmp.ne.s32.totalorder %s42, %s43
      %p54 = scmp.eq.s32.totalorder %s20, 0
      %p55 = por %p53, %p54
      %p56 = scmp.ne.s32.totalorder %s42, %s43
      %p57 = scmp.eq.s32.totalorder %s21, 3
      %p58 = por %p56, %p57
      %p60 = scmp.ne.s32.totalorder %s43, %s59
      %p61 = scmp.eq.s32.totalorder %s21, 0
      %p62 = por %p60, %p61
      %s64 = sadd.s32 %s63, 1
      %p67 = scmp.eq.s32.totalorder %s15, 3
      %p68 = scmp.ne.s32.totalorder %s63, %s65
      %p69 = scmp.eq.s32.totalorder %s15, 0
      %p70 = por %p68, %p69
      %p71 = scmp.ne.s32.totalorder %s63, %s65
      %p72 = scmp.eq.s32.totalorder %s20, 3
      %p73 = por %p71, %p72
      %p74 = scmp.ne.s32.totalorder %s65, %s66
      %p75 = scmp.eq.s32.totalorder %s20, 0
      %p76 = por %p74, %p75
      %p77 = scmp.ne.s32.totalorder %s65, %s66
      %p78 = scmp.eq.s32.totalorder %s21, 3
      %p79 = por %p77, %p78
      %p81 = scmp.ne.s32.totalorder %s66, %s80
      %p82 = scmp.eq.s32.totalorder %s21, 0
      %p83 = por %p81, %p82
      %s85 = sadd.s32 %s84, 1
      %p88 = scmp.eq.s32.totalorder %s15, 3
      %p89 = scmp.ne.s32.totalorder %s84, %s86
      %p90 = scmp.eq.s32.totalorder %s15, 0
      %p91 = por %p89, %p90
      %p92 = scmp.ne.s32.totalorder %s84, %s86
      %p93 = scmp.eq.s32.totalorder %s20, 3
      %p94 = por %p92, %p93
      %p95 = scmp.ne.s32.totalorder %s86, %s87
      %p96 = scmp.eq.s32.totalorder %s20, 0
      %p97 = por %p95, %p96
      %p98 = scmp.ne.s32.totalorder %s86, %s87
      %p99 = scmp.eq.s32.totalorder %s21, 3
      %p100 = por %p98, %p99
      %p102 = scmp.ne.s32.totalorder %s87, %s101
      %p103 = scmp.eq.s32.totalorder %s21, 0
      %p104 = por %p102, %p103
      %s105 = ssub.s32 %s22, %s34
      %s106 = ssub.s32 %s23, %s30
      %s107 = sor.u32 %s105, %s106
      %p108 = scmp.eq.s32.totalorder %s107, 0
      %s110 = sadd.s32 %s109, 1
      %s111 = scalar_select %p108, %s109, %s110
      %p114 = pneg %p108
      %p115 = scmp.eq.s32.totalorder %s15, 3
      %p116 = por %p114, %p115
      %p117 = scmp.ne.s32.totalorder %s109, %s112
      %p118 = scmp.eq.s32.totalorder %s15, 0
      %p119 = por %p117, %p118
      %p120 = scmp.ne.s32.totalorder %s109, %s112
      %p121 = scmp.eq.s32.totalorder %s20, 3
      %p122 = por %p120, %p121
      %p123 = scmp.ne.s32.totalorder %s112, %s113
      %p124 = scmp.eq.s32.totalorder %s20, 0
      %p125 = por %p123, %p124
      %p126 = scmp.ne.s32.totalorder %s112, %s113
      %p127 = scmp.eq.s32.totalorder %s21, 3
      %p128 = por %p126, %p127
      %p130 = scmp.ne.s32.totalorder %s113, %s129
      %p131 = scmp.eq.s32.totalorder %s21, 0
      %p132 = por %p130, %p131
      %p133 = scmp.le.s32.totalorder 1, %s15
      %p134 = scmp.lt.s32.totalorder %s15, 5
      %p135 = pnand %p133, %p134
      %p136 = pneg %p135
      // Predicated region
      $region9: #{tpu_custom_call.1} parent=5 // pred_check
        _
      $region10: #{tpu_custom_call.1} parent=5 // pred_check_branch
        %138 = sbr.rel (%p135) target = $region12
      $region11: #{tpu_custom_call.1} parent=5 // pred_region
        %s139 = ssub.s32 %s15, 1
        // Predicated region
        $region13: #{tpu_custom_call.1} parent=11 // pred_check
          %p140 = pneg %p76
        $region14: #{tpu_custom_call.1} parent=11 // pred_check_branch
          %142 = sbr.rel (%p140) target = $region16
        $region15: #{tpu_custom_call.1} parent=11 // pred_region
          _
        $region16: #{tpu_custom_call.1} parent=11 // pred_fallthru
          _
        // Predicated region
        $region17: #{tpu_custom_call.1} parent=11 // pred_check
          %p143 = pneg %p97
        $region18: #{tpu_custom_call.1} parent=11 // pred_check_branch
          %145 = sbr.rel (%p143) target = $region20
        $region19: #{tpu_custom_call.1} parent=11 // pred_region
          _
        $region20: #{tpu_custom_call.1} parent=11 // pred_fallthru
          _
      $region12: #{tpu_custom_call.1} parent=5 // pred_fallthru
        _
      %p146 = scmp.lt.s32.totalorder %s15, 4
      // Predicated region
      $region21: #{tpu_custom_call.1} parent=5 // pred_check
        %p147 = pneg %p146
      $region22: #{tpu_custom_call.1} parent=5 // pred_check_branch
        %149 = sbr.rel (%p147) target = $region24
      $region23: #{tpu_custom_call.1} parent=5 // pred_region
        // Predicated region
        $region25: #{tpu_custom_call.1} parent=23 // pred_check
          %p150 = pneg %p49
        $region26: #{tpu_custom_call.1} parent=23 // pred_check_branch
          %152 = sbr.rel (%p150) target = $region28
        $region27: #{tpu_custom_call.1} parent=23 // pred_region
          %s153 = sand.u32 %s39, 1
          %s154 = scalar_lea.sflag [#allocation3], %s153
          %s155 = sand.u32 %s39, 1
          %s156 = smul.addr %s155, 4
          %s157 = scalar_lea.vmem [#allocation2], %s156
          %s159 = ssub.s32 64, 64
          %160 = vsyncadd %s154, %s159
          %s161 = smul.addr %s22, 2
          %s162 = sadd.s32 %s23, %s161
          %s163 = smul.addr %s162, 64
          %s164 = scalar_lea.hbm %s0, %s163
          %s166 = sshll.u32 %s157, 4
          %s167 = int_to_ptr.vmem [resolvable:$true] %s166
          %169 = dma.hbm_to_vmem [thread:$0]  %s164, 64, %s167, %s154
        $region28: #{tpu_custom_call.1} parent=23 // pred_fallthru
          _
      $region24: #{tpu_custom_call.1} parent=5 // pred_fallthru
        _
      %p170 = scmp.le.s32.totalorder 1, %s15
      %p171 = scmp.lt.s32.totalorder %s15, 5
      %p172 = pnand %p170, %p171
      %p173 = pneg %p172
      // Predicated region
      $region29: #{tpu_custom_call.1} parent=5 // pred_check
        _
      $region30: #{tpu_custom_call.1} parent=5 // pred_check_branch
        %175 = sbr.rel (%p172) target = $region32
      $region31: #{tpu_custom_call.1} parent=5 // pred_region
        %s176 = ssub.s32 %s15, 1
        %s177 = sand.u32 %s42, 1
        %s178 = scalar_lea.sflag [#allocation3], %s177
        %s179 = sand.u32 %s42, 1
        %s180 = smul.addr %s179, 4
        %s181 = scalar_lea.vmem [#allocation2], %s180
        // Predicated region
        $region33: #{tpu_custom_call.1} parent=31 // pred_check
          %p182 = pneg %p55
        $region34: #{tpu_custom_call.1} parent=31 // pred_check_branch
          %184 = sbr.rel (%p182) target = $region36
        $region35: #{tpu_custom_call.1} parent=31 // pred_region
          %185 = dma.done %s178, 64
        $region36: #{tpu_custom_call.1} parent=31 // pred_fallthru
          _
        %s186 = sand.u32 %s42, 1
        %s187 = scalar_lea.sflag [#allocation3], %s186
        %s188 = sand.u32 %s42, 1
        %s189 = smul.addr %s188, 4
        %s190 = scalar_lea.vmem [#allocation2], %s189
        %p191 = pneg %p55
        %p192 = pneg %p52
        %p193 = pneg %p76
        %p194 = pneg %p73
        %p195 = pneg %p97
        %p196 = pneg %p94
        %p197 = pneg %p125
        %p198 = pneg %p122
        %s199 = sand.u32 %s112, 1
        %s200 = scalar_lea.sflag [#allocation4], %s199
        %s201 = sand.u32 %s112, 1
        %s202 = smul.addr %s201, 4
        %s203 = scalar_lea.vmem [#allocation5], %s202
        %v204 = vld [vmem:[%s181] sm:$0xf]
        %v205 = vld [vmem:[%s1] sm:$0xf]
        %v206 = vld [vmem:[%s2] sm:$0xf]
        %208 = vset.pattern.permute.xlu0 0
        %209 = vperm.xlu0 %208, %v206
        %v210 = vpop.permute.xlu0 %209
        %vm212 = vcmask 31744
        %v214 = vsel %vm212, %v205, 0
        %vm216 = vcmask 1043456
        %v218 = vsel %vm216, %v204, 0
        %220 = vmatprep.subr.mxu0 0.0
        %221 = vmatpush1.msra.mxu0 %v218
        %222 = vmatprep.subr.mxu0 0.0
        %223 = vmatpush1.msra.mxu0 0.0
        %224 = vmatprep.subr.mxu0 0.0
        %225 = vmatpush1.msra.mxu0 0.0
        %226 = vmatprep.subr.mxu0 0.0
        %227 = vmatpush1.msra.mxu0 0.0
        %228 = vmatprep.subr.mxu0 0.0
        %229 = vmatpush1.msra.mxu0 0.0
        %230 = vmatprep.subr.mxu0 0.0
        %231 = vmatpush1.msra.mxu0 0.0
        %232 = vmatprep.subr.mxu0 0.0
        %233 = vmatpush1.msra.mxu0 0.0
        %234 = vmatprep.subr.mxu0 0.0
        %235 = vmatpush1.msra.mxu0 0.0
        %236 = vmatprep.subr.mxu0 0.0
        %237 = vmatpush1.msra.mxu0 0.0
        %238 = vmatprep.subr.mxu0 0.0
        %239 = vmatpush1.msra.mxu0 0.0
        %240 = vmatprep.subr.mxu0 0.0
        %241 = vmatpush1.msra.mxu0 0.0
        %242 = vmatprep.subr.mxu0 0.0
        %243 = vmatpush1.msra.mxu0 0.0
        %244 = vmatprep.subr.mxu0 0.0
        %245 = vmatpush1.msra.mxu0 0.0
        %246 = vmatprep.subr.mxu0 0.0
        %247 = vmatpush1.msra.mxu0 0.0
        %248 = vmatprep.subr.mxu0 0.0
        %249 = vmatpush1.msra.mxu0 0.0
        %250 = vmatprep.subr.mxu0 0.0
        %251 = vmatpush1.msra.mxu0 0.0
        %252 = vmatprep.subr.mxu0 0.0
        %253 = vmatpush1.msra.mxu0 0.0
        %254 = vmatprep.subr.mxu0 0.0
        %255 = vmatpush1.msra.mxu0 0.0
        %256 = vmatprep.subr.mxu0 0.0
        %257 = vmatpush1.msra.mxu0 0.0
        %258 = vmatprep.subr.mxu0 0.0
        %259 = vmatpush1.msra.mxu0 0.0
        %260 = vmatprep.subr.mxu0 0.0
        %261 = vmatpush1.msra.mxu0 0.0
        %262 = vmatprep.subr.mxu0 0.0
        %263 = vmatpush1.msra.mxu0 0.0
        %264 = vmatprep.subr.mxu0 0.0
        %265 = vmatpush1.msra.mxu0 0.0
        %266 = vmatprep.subr.mxu0 0.0
        %267 = vmatpush1.msra.mxu0 0.0
        %268 = vmatprep.subr.mxu0 0.0
        %269 = vmatpush1.msra.mxu0 0.0
        %270 = vmatprep.subr.mxu0 0.0
        %271 = vmatpush1.msra.mxu0 0.0
        %272 = vmatprep.subr.mxu0 0.0
        %273 = vmatpush1.msra.mxu0 0.0
        %274 = vmatprep.subr.mxu0 0.0
        %275 = vmatpush1.msra.mxu0 0.0
        %276 = vmatprep.subr.mxu0 0.0
        %277 = vmatpush1.msra.mxu0 0.0
        %278 = vmatprep.subr.mxu0 0.0
        %279 = vmatpush1.msra.mxu0 0.0
        %280 = vmatprep.subr.mxu0 0.0
        %281 = vmatpush1.msra.mxu0 0.0
        %282 = vmatprep.subr.mxu0 0.0
        %283 = vmatpush1.msra.mxu0 0.0
        %284 = vmatprep.mubr.f32.mxu0 0.0
        %285 = vmatmul.mubr.f32.gmra.mrb[0].mxu0 %v214
        %v286 = vpop.f32.mrb[0].mxu0
        %v287 = vadd.f32 %v210, %v286
        %v288 = vpop.f32.mrb[0].mxu0
        %289 = vdwg.mxu0
        %v290 = vadd.f32 %v204, %v287
        %291 = vst [vmem:[%s203] sm:$0xf] %v290
        %s292 = sand.u32 %s112, 1
        %s293 = scalar_lea.sflag [#allocation4], %s292
        %s294 = sand.u32 %s112, 1
        %s295 = smul.addr %s294, 4
        %s296 = scalar_lea.vmem [#allocation5], %s295
        // Predicated region
        $region37: #{tpu_custom_call.1} parent=31 // pred_check
          %p297 = pneg %p122
        $region38: #{tpu_custom_call.1} parent=31 // pred_check_branch
          %299 = sbr.rel (%p297) target = $region40
        $region39: #{tpu_custom_call.1} parent=31 // pred_region
          %s301 = ssub.s32 64, 64
          %302 = vsyncadd %s293, %s301
          %s303 = smul.addr %s24, 2
          %s304 = sadd.s32 %s25, %s303
          %s305 = smul.addr %s304, 64
          %s306 = scalar_lea.hbm %s3, %s305
          %s308 = sshll.u32 %s296, 4
          %s309 = int_to_ptr.vmem [resolvable:$true] %s308
          %311 = dma.vmem_to_hbm [thread:$0]  %s309, 64, %s306, %s293
        $region40: #{tpu_custom_call.1} parent=31 // pred_fallthru
          _
      $region32: #{tpu_custom_call.1} parent=5 // pred_fallthru
        _
      %p312 = scmp.le.s32.totalorder 2, %s15
      // Predicated region
      $region41: #{tpu_custom_call.1} parent=5 // pred_check
        %p313 = pneg %p312
      $region42: #{tpu_custom_call.1} parent=5 // pred_check_branch
        %315 = sbr.rel (%p313) target = $region44
      $region43: #{tpu_custom_call.1} parent=5 // pred_region
        %s316 = ssub.s32 %s15, 2
        // Predicated region
        $region45: #{tpu_custom_call.1} parent=43 // pred_check
          %p317 = pneg %p128
        $region46: #{tpu_custom_call.1} parent=43 // pred_check_branch
          %319 = sbr.rel (%p317) target = $region48
        $region47: #{tpu_custom_call.1} parent=43 // pred_region
          %s320 = sand.u32 %s113, 1
          %s321 = scalar_lea.sflag [#allocation4], %s320
          %s322 = sand.u32 %s113, 1
          %s323 = smul.addr %s322, 4
          %s324 = scalar_lea.vmem [#allocation5], %s323
          %325 = dma.done %s321, 64
        $region48: #{tpu_custom_call.1} parent=43 // pred_fallthru
          _
      $region44: #{tpu_custom_call.1} parent=5 // pred_fallthru
        _
    $region6: #{tpu_custom_call.1} parent=1 // loop_footer
      %s19 = sadd.s32 1, %s15
    $region7: #{tpu_custom_call.1} parent=1 // loop_footer_branch
      %14 = sbr.rel target = $region3
    $region8: #{tpu_custom_call.1} parent=1 // loop_exit
      _
    %326 = vsyncpa [#allocation3], 1
    %s327 = scalar_lea.sflag [#allocation3], 1
    %328 = vsyncpa %s327, 1
    %329 = vsyncpa [#allocation4], 1
    %s330 = scalar_lea.sflag [#allocation4], 1
    %331 = vsyncpa %s330, 1

</llo_original>
